<compile_context>
chip_gen: v7x
topology: tpu7x:2x2x1
jax: 0.10.0
libtpu: 0.0.40
codegen_flags: <defaults>
</compile_context>

<pallas_src>
import jax
import jax.numpy as jnp
from jax.experimental import pallas as pl
from jax.experimental.pallas import tpu as pltpu

LANE = 128      # TPU lane width (last dim of every block)
TM_MAX = 2048   # rows per block: 2048 * 128 * 4 B = 1 MiB per input block


def _make_kernel(rows, tm, spc, need_mask):
    """Build the reduction kernel closure (all tile params are static)."""

    def kernel(mu_ref, lv_ref, out_ref):
        i = pl.program_id(1)          # sequential ("arbitrary") reduction axis

        @pl.when(i == 0)
        def _():
            out_ref[...] = jnp.zeros_like(out_ref)

        mu = mu_ref[...].astype(jnp.float32)
        lv = lv_ref[...].astype(jnp.float32)
        # VPU elementwise + EUP exp; f32 exp has plenty of slack under the
        # HBM roofline for this memory-bound kernel.
        term = 1.0 + lv - mu * mu - jnp.exp(lv)

        if need_mask:
            c = pl.program_id(0)
            base = (c * spc + i) * tm                       # unclamped tile origin
            row = jax.lax.broadcasted_iota(jnp.int32, (tm, LANE), 0)
            term = jnp.where(base + row < rows, term, 0.0)  # zero OOB / dup rows

        out_ref[...] += term          # pure VPU accumulate, stays in VMEM

    return kernel


@jax.jit
def kl_loss(mu, logvar):
    assert mu.shape == logvar.shape, "mu and logvar must have the same shape"

    n = mu.size
    if n == 0:
        return jnp.float32(0.0)

    mu_f = mu.reshape(-1)
    lv_f = logvar.reshape(-1)

    # Pad only to a lane multiple (rare, <128 elements); pad contributes 0
    # because 1 + 0 - 0 - exp(0) == 0.
    pad = (-n) % LANE
    if pad:
        mu_f = jnp.pad(mu_f, (0, pad))
        lv_f = jnp.pad(lv_f, (0, pad))

    rows = mu_f.size // LANE
    mu2 = mu_f.reshape(rows, LANE)
    lv2 = lv_f.reshape(rows, LANE)

    # Guarantee at least 8 rows so the block respects the (8, 128) tiling
    # constraint (tiny inputs only; the pad rows also contribute 0).
    if rows < 8:
        extra = 8 - rows
        mu2 = jnp.pad(mu2, ((0, extra), (0, 0)))
        lv2 = jnp.pad(lv2, ((0, extra), (0, 0)))
        rows = 8

    tm = min(TM_MAX, (rows // 8) * 8)          # multiple of 8, <= rows
    steps = pl.cdiv(rows, tm)                  # total row tiles
    nsplit = 2 if steps >= 2 else 1            # v7x: 2 TCs; no-op elsewhere
    spc = pl.cdiv(steps, nsplit)               # tiles per parallel chunk
    # Mask whenever the last tile is partial or a chunk has a duplicated
    # (clamped) tail tile.
    need_mask = (rows % tm != 0) or (nsplit * spc != steps)

    def in_map(c, i):
        # Clamp so duplicated tail iterations re-read the last real tile
        # (their contribution is masked to zero in the kernel) and the DMA
        # never goes out of range.
        return (jnp.minimum(c * spc + i, steps - 1), 0)

    out = pl.pallas_call(
        _make_kernel(rows, tm, spc, need_mask),
        out_shape=jax.ShapeDtypeStruct((nsplit * tm, LANE), jnp.float32),
        grid_spec=pltpu.PrefetchScalarGridSpec(
            num_scalar_prefetch=0,
            grid=(nsplit, spc),
            in_specs=[
                pl.BlockSpec((tm, LANE), in_map),
                pl.BlockSpec((tm, LANE), in_map),
            ],
            out_specs=pl.BlockSpec((tm, LANE), lambda c, i: (c, 0)),
        ),
        compiler_params=pltpu.CompilerParams(
            dimension_semantics=("parallel", "arbitrary"),
        ),
    )(mu2, lv2)

    # Single final reduction + scale on a tiny array (<= nsplit * 1 MiB).
    return -0.5 * jnp.sum(out)


if __name__ == "__main__":
    key = jax.random.PRNGKey(0)

    def ref_loss(mu, logvar):
        return -0.5 * jnp.sum(1.0 + logvar - mu * mu - jnp.exp(logvar))

    def check(shape, k):
        k_mu, k_lv = jax.random.split(k)
        mu = jax.random.normal(k_mu, shape, dtype=jnp.float32)
        logvar = jax.random.normal(k_lv, shape, dtype=jnp.float32) * 0.5
        loss = kl_loss(mu, logvar)
        jax.block_until_ready(loss)
        ref = ref_loss(mu, logvar)
        assert jnp.allclose(loss, ref, rtol=1e-4, atol=1e-3), (shape, loss, ref)

    keys = jax.random.split(key, 3)
    # Primary small VAE-latent-like case (batch=2, C=4, H=W=16).
    check((2, 4, 16, 16), keys[0])
    # Non-128-aligned case: exercises lane padding + partial-tile masking.
    check((3, 5, 7, 11), keys[1])
    # Multi-tile case: exercises big tiles, the 2-way parallel split and the
    # clamped / fully-masked duplicate tail tile.
    check((2, 3, 701, 129), keys[2])

    print("KERNEL_OK")
</pallas_src>

<mosaic_0001>
module attributes {stable_mosaic.version = 11 : i64} {
  func.func @kernel(%arg0: i32, %arg1: i32, %arg2: memref<16x128xf32, #tpu.memory_space<vmem>>, %arg3: memref<16x128xf32, #tpu.memory_space<vmem>>, %arg4: memref<16x128xf32, #tpu.memory_space<vmem>>) attributes {dimension_semantics = [#tpu.dimension_semantics<parallel>, #tpu.dimension_semantics<arbitrary>], iteration_bounds = array<i64: 1, 1>, scalar_prefetch = 0 : i64, scratch_operands = 0 : i64, tpu.core_type = #tpu.core_type<tc>, window_params = [{transform_indices = @transform_0, window_bounds = array<i64: 16, 128>}, {transform_indices = @transform_1, window_bounds = array<i64: 16, 128>}, {transform_indices = @transform_2, window_bounds = array<i64: 16, 128>}]} {
    %c0_i32 = arith.constant 0 : i32
    %0 = arith.cmpi eq, %arg1, %c0_i32 : i32
    %1 = arith.extui %0 : i1 to i32
    %c0_i32_0 = arith.constant 0 : i32
    %2 = arith.cmpi ne, %1, %c0_i32_0 : i32
    scf.if %2 {
      %cst_8 = arith.constant 0.000000e+00 : f32
      %14 = vector.broadcast %cst_8 : f32 to vector<16x128xf32>
      %c0_9 = arith.constant 0 : index
      %c0_10 = arith.constant 0 : index
      %15 = vector.load %arg4[%c0_9, %c0_10] : memref<16x128xf32, #tpu.memory_space<vmem>>, vector<16x128xf32>
      tpu.vector_store %arg4[%c0_9, %c0_10], %14 {strides = array<i32>} : memref<16x128xf32, #tpu.memory_space<vmem>>, vector<16x128xf32>,
    } else {
    }
    %c0 = arith.constant 0 : index
    %c0_1 = arith.constant 0 : index
    %3 = vector.load %arg2[%c0, %c0_1] : memref<16x128xf32, #tpu.memory_space<vmem>>, vector<16x128xf32>
    %c0_2 = arith.constant 0 : index
    %c0_3 = arith.constant 0 : index
    %4 = vector.load %arg3[%c0_2, %c0_3] : memref<16x128xf32, #tpu.memory_space<vmem>>, vector<16x128xf32>
    %cst = arith.constant 1.000000e+00 : f32
    %5 = vector.broadcast %cst : f32 to vector<16x128xf32>
    %6 = arith.addf %5, %4 : vector<16x128xf32>
    %7 = arith.mulf %3, %3 : vector<16x128xf32>
    %8 = arith.subf %6, %7 : vector<16x128xf32>
    %9 = math.exp %4 : vector<16x128xf32>
    %10 = arith.subf %8, %9 : vector<16x128xf32>
    %c0_4 = arith.constant 0 : index
    %c0_5 = arith.constant 0 : index
    %11 = vector.load %arg4[%c0_4, %c0_5] : memref<16x128xf32, #tpu.memory_space<vmem>>, vector<16x128xf32>
    %12 = arith.addf %11, %10 : vector<16x128xf32>
    %c0_6 = arith.constant 0 : index
    %c0_7 = arith.constant 0 : index
    %13 = vector.load %arg4[%c0_6, %c0_7] : memref<16x128xf32, #tpu.memory_space<vmem>>, vector<16x128xf32>
    tpu.vector_store %arg4[%c0_6, %c0_7], %12 {strides = array<i32>} : memref<16x128xf32, #tpu.memory_space<vmem>>, vector<16x128xf32>,
    return
  }
  func.func @transform_0(%arg0: i32, %arg1: i32) -> (i32, i32) {
    %c1_i32 = arith.constant 1 : i32
    %0 = arith.muli %arg0, %c1_i32 : i32
    %1 = arith.addi %0, %arg1 : i32
    %c0_i32 = arith.constant 0 : i32
    %2 = arith.minsi %1, %c0_i32 : i32
    %c0_i32_0 = arith.constant 0 : i32
    %c0_i32_1 = arith.constant 0 : i32
    return %2, %c0_i32_0 : i32, i32
  }
  func.func @transform_1(%arg0: i32, %arg1: i32) -> (i32, i32) {
    %c1_i32 = arith.constant 1 : i32
    %0 = arith.muli %arg0, %c1_i32 : i32
    %1 = arith.addi %0, %arg1 : i32
    %c0_i32 = arith.constant 0 : i32
    %2 = arith.minsi %1, %c0_i32 : i32
    %c0_i32_0 = arith.constant 0 : i32
    %c0_i32_1 = arith.constant 0 : i32
    return %2, %c0_i32_0 : i32, i32
  }
  func.func @transform_2(%arg0: i32, %arg1: i32) -> (i32, i32) {
    %c0_i32 = arith.constant 0 : i32
    %c0_i32_0 = arith.constant 0 : i32
    return %arg0, %c0_i32 : i32, i32
  }
}

</mosaic_0001>

<llo_original>
// kernel: kl_loss.1
$region0: #{kl_loss.1}
  #allocation0 [shape = 'u32[]', space=smem, size = 0x4, offset = 0x4, fixed_abs, tag = 'smem constant byte address 0x4 - core index']
  #allocation1 [shape = 'u32[144,128]{1,0:T(1,128)}', space=vmem, size = 0x12000, scoped, tag = 'internal scratch']
  %s0 = inlined_call_operand.vmem [shape: f32[16,128], index: 0, kind: input, shape index: {}]
  %s1 = inlined_call_operand.vmem [shape: f32[16,128], index: 1, kind: input, shape index: {}]
  %s2 = inlined_call_operand.vmem [shape: f32[16,128], index: 2, kind: output, shape index: {}]
  %s3 = sld [smem:[#allocation0]]
  $region22: #{kl_loss.1} parent=0
    _
  %s5 = ssub.s32 1, %s3
  %s6 = scalar_select 0, %s5, %s3
  // Predicated region
  $region2: #{kl_loss.1} parent=0 // pred_check
    _
  $region3: #{kl_loss.1} parent=0 // pred_check_branch
    %8 = sbr.rel (0) target = $region5
  $region4: #{kl_loss.1} parent=0 // pred_region
    %s9 = sadd.s32 0, 0
    %p10 = scmp.lt.s32.totalorder %s9, 0
    %s11 = scalar_select %p10, %s9, 0
    %s12 = smul.u32 2, %s11
    %p13 = scmp.lt.s32.totalorder %s12, 1
    %s14 = scalar_select %p13, %s12, 1
    %s15 = smul.addr %s14, 8
    %s16 = scalar_lea.vmem %s0, %s15
    %s17 = sadd.s32 0, 0
    %p18 = scmp.lt.s32.totalorder %s17, 0
    %s19 = scalar_select %p18, %s17, 0
    %s20 = smul.u32 2, %s19
  $region5: #{kl_loss.1} parent=0 // pred_fallthru
    _
  // Predicated region
  $region6: #{kl_loss.1} parent=0 // pred_check
    _
  $region7: #{kl_loss.1} parent=0 // pred_check_branch
    %22 = sbr.rel (0) target = $region9
  $region8: #{kl_loss.1} parent=0 // pred_region
    %s23 = sadd.s32 0, 0
    %p24 = scmp.lt.s32.totalorder %s23, 0
    %s25 = scalar_select %p24, %s23, 0
    %s26 = smul.u32 2, %s25
    %p27 = scmp.lt.s32.totalorder %s26, 1
    %s28 = scalar_select %p27, %s26, 1
    %s29 = smul.addr %s28, 8
    %s30 = scalar_lea.vmem %s1, %s29
    %s31 = sadd.s32 0, 0
    %p32 = scmp.lt.s32.totalorder %s31, 0
    %s33 = scalar_select %p32, %s31, 0
    %s34 = smul.u32 2, %s33
  $region9: #{kl_loss.1} parent=0 // pred_fallthru
    _
  %s35 = sadd.s32 0, 0
  %p36 = scmp.lt.s32.totalorder %s35, 0
  %s37 = scalar_select %p36, %s35, 0
  %s38 = smul.u32 2, %s37
  %p39 = scmp.lt.s32.totalorder %s38, 1
  %s40 = scalar_select %p39, %s38, 1
  %s41 = smul.addr %s40, 8
  %s42 = scalar_lea.vmem %s0, %s41
  %s43 = sadd.s32 0, 0
  %p44 = scmp.lt.s32.totalorder %s43, 0
  %s45 = scalar_select %p44, %s43, 0
  %s46 = smul.u32 2, %s45
  %p47 = scmp.lt.s32.totalorder %s46, 1
  %s48 = scalar_select %p47, %s46, 1
  %s49 = smul.addr %s48, 8
  %s50 = scalar_lea.vmem %s1, %s49
  %s51 = sadd.s32 0, 0
  %p52 = scmp.lt.s32.totalorder %s51, 0
  %s53 = scalar_select %p52, %s51, 0
  %s54 = smul.u32 2, %s53
  %p55 = scmp.lt.s32.totalorder %s54, 1
  %s56 = scalar_select %p55, %s54, 1
  %s57 = smul.addr %s56, 8
  %s58 = scalar_lea.vmem %s0, %s57
  %s59 = sadd.s32 0, 0
  %p60 = scmp.lt.s32.totalorder %s59, 0
  %s61 = scalar_select %p60, %s59, 0
  %s62 = smul.u32 2, %s61
  %s63 = sadd.s32 0, 0
  %p64 = scmp.lt.s32.totalorder %s63, 0
  %s65 = scalar_select %p64, %s63, 0
  %s66 = smul.u32 2, %s65
  %p67 = scmp.lt.s32.totalorder %s66, 1
  %s68 = scalar_select %p67, %s66, 1
  %s69 = smul.addr %s68, 8
  %s70 = scalar_lea.vmem %s1, %s69
  %s71 = sadd.s32 0, 0
  %p72 = scmp.lt.s32.totalorder %s71, 0
  %s73 = scalar_select %p72, %s71, 0
  %s74 = smul.u32 2, %s73
  %p75 = scmp.eq.s32.totalorder 0, 0
  // Predicated region
  $region10: #{kl_loss.1} parent=0 // pred_check
    %p76 = pneg %p75
  $region11: #{kl_loss.1} parent=0 // pred_check_branch
    %78 = sbr.rel (%p76) target = $region13
  $region12: #{kl_loss.1} parent=0 // pred_region
    %79 = vst [vmem:[%s2] sm:$0xff] 0.0
    %80 = vst [vmem:[%s2 + $0x8] sm:$0xff] 0.0
  $region13: #{kl_loss.1} parent=0 // pred_fallthru
    _
  %v81 = vld [vmem:[%s58] sm:$0xff]
  %v82 = vld [vmem:[%s58 + $0x8] sm:$0xff]
  %v83 = vld [vmem:[%s70] sm:$0xff]
  %v84 = vld [vmem:[%s70 + $0x8] sm:$0xff]
  %v85 = vadd.f32 %v83, 1.0
  %v86 = vadd.f32 %v84, 1.0
  %v87 = vmul.f32 %v81, %v81
  %v88 = vmul.f32 %v82, %v82
  %v89 = vsub.f32 %v85, %v87
  %v90 = vsub.f32 %v86, %v88
  %v91 = vmul.f32 %v83, 1.442695
  %v92 = vpow.pop %v91
  %v93 = vmul.f32 %v84, 1.442695
  %v94 = vpow.pop %v93
  %v95 = vsub.f32 %v89, %v92
  %v96 = vsub.f32 %v90, %v94
  %v97 = vld [vmem:[%s2] sm:$0xff]
  %v98 = vld [vmem:[%s2 + $0x8] sm:$0xff]
  %v99 = vadd.f32 %v97, %v95
  %v100 = vadd.f32 %v98, %v96
  %101 = vst [vmem:[%s2] sm:$0xff] %v99
  %102 = vst [vmem:[%s2 + $0x8] sm:$0xff] %v100
  // Predicated region
  $region14: #{kl_loss.1} parent=0 // pred_check
    _
  $region15: #{kl_loss.1} parent=0 // pred_check_branch
    %104 = sbr.rel (0) target = $region17
  $region16: #{kl_loss.1} parent=0 // pred_region
    _
  $region17: #{kl_loss.1} parent=0 // pred_fallthru
    _
  // Predicated region
  $region18: #{kl_loss.1} parent=0 // pred_check
    _
  $region19: #{kl_loss.1} parent=0 // pred_check_branch
    %106 = sbr.rel (0) target = $region21
  $region20: #{kl_loss.1} parent=0 // pred_region
    _
  $region21: #{kl_loss.1} parent=0 // pred_fallthru
    _

</llo_original>
